<compile_context>
chip_gen: v6e
topology: v6e:2x2x1
jax: 0.10.0
libtpu: 0.0.40
codegen_flags: <defaults>
</compile_context>

<pallas_src>
import functools
import math

import jax
import jax.numpy as jnp
from jax import lax
from jax.experimental import pallas as pl
from jax.experimental.pallas import tpu as pltpu

_LANES = 128
_SUBLANES = 8
_ALIGN = _SUBLANES * _LANES          # 1024-element (one (8,128) tile) alignment
_FOLD_ROWS_MAX = 1024                # rows per in-kernel fold chunk (~512 KiB f32)


def _device_kind():
    try:
        return jax.devices()[0].device_kind.lower()
    except Exception:
        return ""


def _default_config():
    """Generation-aware (block_rows, num_partials, is_v7x)."""
    kind = _device_kind()
    if ("v7" in kind) or ("7x" in kind):
        return 8192, 2, True      # 2 TensorCores / chip, ~3.2 TB/s HBM per TC
    if "v6" in kind:
        return 8192, 1, False     # 32 MiB scoped-VMEM default
    if ("v5" in kind) or ("v4" in kind):
        return 4096, 1, False     # v5e: 16 MiB scoped-VMEM default
    return 2048, 1, False         # unknown / older chips: stay conservative


def _mse_partial_sums_kernel(o_ref, t_ref, out_ref, acc_ref, *,
                             n_blocks, rows_in_last, fold_rows):
    c = pl.program_id(0)              # partial / core index (leading axis)
    i = pl.program_id(1)              # block index within this partial
    inner = pl.num_programs(1)
    blk = c * inner + i
    block_rows = o_ref.shape[0]
    n_chunks = block_rows // fold_rows

    @pl.when(i == 0)
    def _init():
        acc_ref[...] = jnp.zeros_like(acc_ref)

    def _fold(mask_rows):
        def chunk(j, carry):
            r0 = pl.multiple_of(j * fold_rows, fold_rows)
            diff = (o_ref[pl.ds(r0, fold_rows), :].astype(jnp.float32)
                    - t_ref[pl.ds(r0, fold_rows), :].astype(jnp.float32))
            if mask_rows:
                # Only the (single) ragged last block pays for the select.
                rid = lax.broadcasted_iota(jnp.int32, (fold_rows, _LANES), 0) + r0
                diff = jnp.where(rid < rows_in_last, diff, 0.0)
            sq = diff * diff
            # Fold (fold_rows, 128) into the (8, 128) vreg-shaped accumulator:
            # pure VPU vreg adds, no cross-lane/XLU reduction in the hot loop.
            acc_ref[...] += sq.reshape(-1, _SUBLANES, _LANES).sum(axis=0)
            return carry
        lax.fori_loop(0, n_chunks, chunk, 0, unroll=n_chunks <= 8)

    if rows_in_last == block_rows:          # slab divides evenly into blocks
        @pl.when(blk < n_blocks)
        def _accumulate():
            _fold(False)
    else:                                   # ragged last block: mask its rows
        @pl.when(blk < n_blocks - 1)
        def _accumulate_full():
            _fold(False)

        @pl.when(blk == n_blocks - 1)
        def _accumulate_last():
            _fold(True)

    @pl.when(i == inner - 1)
    def _finalize():
        out_ref[...] = acc_ref[...]         # lane-dense (8,128) partial


def _run_partial_sums(o_slab, t_slab, *, block_rows, num_partials, n_blocks,
                      rows_in_last, use_core_parallel):
    rows = o_slab.shape[0]
    inner = -(-n_blocks // num_partials)
    fold_rows = math.gcd(block_rows, _FOLD_ROWS_MAX)

    kernel = functools.partial(_mse_partial_sums_kernel, n_blocks=n_blocks,
                               rows_in_last=rows_in_last, fold_rows=fold_rows)

    def block_index(c, i):
        # Clamp so masked-out trailing steps of the last partial stay in bounds.
        return (jnp.minimum(c * inner + i, n_blocks - 1), 0)

    itemsize = jnp.dtype(o_slab.dtype).itemsize
    block_bytes = block_rows * _LANES * itemsize
    # 3-deep input pipelining only when it stays well inside every generation's
    # scoped-VMEM default (2 inputs x 3 buffers <= 12 MiB).
    triple_ok = 2 * 3 * block_bytes <= 12 * 1024 * 1024

    cost = pl.CostEstimate(
        flops=3 * rows * _LANES,
        transcendentals=0,
        bytes_accessed=2 * rows * _LANES * itemsize
                       + num_partials * _SUBLANES * _LANES * 4,
    )

    # Preferred -> conservative configs; anything exotic falls back cleanly.
    lead_options = []
    if use_core_parallel:
        cp = getattr(pltpu, "CORE_PARALLEL", None)
        if cp is not None:
            lead_options.append((cp, getattr(pltpu, "ARBITRARY", "arbitrary")))
    lead_options.append(("arbitrary", "arbitrary"))

    pipeline_options = []
    if triple_ok:
        try:
            pipeline_options.append(pl.Buffered(3))
        except Exception:
            pass
    pipeline_options.append(None)

    last_err = None
    for semantics in lead_options:
        for pm in pipeline_options:
            try:
                spec_kwargs = {} if pm is None else {"pipeline_mode": pm}
                in_spec = pl.BlockSpec((block_rows, _LANES), block_index,
                                       **spec_kwargs)
                call = pl.pallas_call(
                    kernel,
                    out_shape=jax.ShapeDtypeStruct(
                        (num_partials * _SUBLANES, _LANES), jnp.float32),
                    grid_spec=pltpu.PrefetchScalarGridSpec(
                        num_scalar_prefetch=0,
                        grid=(num_partials, inner),
                        in_specs=[in_spec, in_spec],
                        out_specs=pl.BlockSpec((_SUBLANES, _LANES),
                                               lambda c, i: (c, 0)),
                        scratch_shapes=[pltpu.VMEM((_SUBLANES, _LANES),
                                                   jnp.float32)],
                    ),
                    compiler_params=pltpu.CompilerParams(
                        dimension_semantics=semantics),
                    cost_estimate=cost,
                )
                return call(o_slab, t_slab)
            except Exception as e:          # fall back to a safer config
                last_err = e
    raise last_err


def mse_loss(outputs, targets, *, block_rows=None, num_partials=None):
    """mean((outputs - targets)**2) with the bulk reduction done in Pallas."""
    assert outputs.shape == targets.shape, "MSELoss requires matching shapes"
    n = int(outputs.size)
    out_dtype = outputs.dtype

    default_rows, default_partials, is_v7x = _default_config()
    if block_rows is None:
        block_rows = default_rows
    if num_partials is None:
        num_partials = default_partials

    o = jnp.ravel(outputs)
    t = jnp.ravel(targets)

    n_main = (n // _ALIGN) * _ALIGN
    if n_main == 0:
        # Tiny input: zero-pad just this small slab up to one (8, 128) tile
        # (padding both operands with zeros contributes exactly 0 to the sum).
        pad = _ALIGN - n
        o_slab = jnp.pad(o, (0, pad)).reshape(_SUBLANES, _LANES)
        t_slab = jnp.pad(t, (0, pad)).reshape(_SUBLANES, _LANES)
        n_main = _ALIGN
        tail_sum = jnp.float32(0.0)
    else:
        if n_main < n:
            # <1024-element ragged tail: a tiny jnp reduce.
            dt = o[n_main:].astype(jnp.float32) - t[n_main:].astype(jnp.float32)
            tail_sum = jnp.sum(dt * dt)
            o_main, t_main = o[:n_main], t[:n_main]
        else:
            tail_sum = jnp.float32(0.0)
            o_main, t_main = o, t
        # Lane-dense (rows, 128) slab in the ORIGINAL dtype; a free bitcast
        # whenever n is already a multiple of 1024.
        o_slab = o_main.reshape(-1, _LANES)
        t_slab = t_main.reshape(-1, _LANES)

    rows = n_main // _LANES                      # multiple of 8
    # Sanitize block size: multiple of 8 sublanes, never larger than the slab.
    block_rows = max(_SUBLANES,
                     (min(int(block_rows), rows) // _SUBLANES) * _SUBLANES)
    n_blocks = -(-rows // block_rows)
    rows_in_last = rows - (n_blocks - 1) * block_rows
    num_partials = max(1, min(int(num_partials), n_blocks))

    partials = _run_partial_sums(
        o_slab, t_slab, block_rows=block_rows, num_partials=num_partials,
        n_blocks=n_blocks, rows_in_last=rows_in_last,
        use_core_parallel=is_v7x and num_partials > 1)

    # NOTE: per-lane f32 accumulation error grows with n_blocks; for N >~ 1e9
    # elements switch to two-level accumulation if bit-level parity with a
    # pairwise-summed reference matters.
    total = jnp.sum(partials) + tail_sum         # tiny final reduce in XLA
    return (total / n).astype(out_dtype)


if __name__ == "__main__":
    key = jax.random.PRNGKey(0)
    k1, k2, k3, k4, k5, k6 = jax.random.split(key, 6)

    # Primary check: small conv-style (N, C, H, W) output/target pair.
    outputs = jax.random.normal(k1, (2, 4, 16, 16), dtype=jnp.float32)
    targets = jax.random.normal(k2, (2, 4, 16, 16), dtype=jnp.float32)
    loss = mse_loss(outputs, targets)
    jax.block_until_ready(loss)
    ref = jnp.mean((outputs - targets) ** 2)
    assert jnp.allclose(loss, ref, rtol=1e-5, atol=1e-6), (loss, ref)

    # Non-128-aligned shape: 1024-aligned prefix through the kernel, jnp tail.
    o2 = jax.random.normal(k3, (3, 7, 101), dtype=jnp.float32)
    t2 = jax.random.normal(k4, (3, 7, 101), dtype=jnp.float32)
    loss2 = mse_loss(o2, t2, block_rows=8)
    jax.block_until_ready(loss2)
    ref2 = jnp.mean((o2 - t2) ** 2)
    assert jnp.allclose(loss2, ref2, rtol=1e-5, atol=1e-6), (loss2, ref2)

    # Ragged last block + explicit 2-partial grid (exercises in-kernel masking).
    o3 = jax.random.normal(k5, (2, 12, 128), dtype=jnp.float32)
    t3 = jax.random.normal(k6, (2, 12, 128), dtype=jnp.float32)
    loss3 = mse_loss(o3, t3, block_rows=16, num_partials=2)
    jax.block_until_ready(loss3)
    ref3 = jnp.mean((o3 - t3) ** 2)
    assert jnp.allclose(loss3, ref3, rtol=1e-5, atol=1e-6), (loss3, ref3)

    print("KERNEL_OK")
</pallas_src>

<mosaic_0001>
module attributes {stable_mosaic.version = 11 : i64} {
  func.func @_mse_partial_sums_kernel(%arg0: i32, %arg1: i32, %arg2: memref<16x128xf32, #tpu.memory_space<vmem>>, %arg3: memref<16x128xf32, #tpu.memory_space<vmem>>, %arg4: memref<8x128xf32, #tpu.memory_space<vmem>>, %arg5: memref<8x128xf32, #tpu.memory_space<vmem>>) attributes {dimension_semantics = [#tpu.dimension_semantics<arbitrary>, #tpu.dimension_semantics<arbitrary>], iteration_bounds = array<i64: 1, 1>, scalar_prefetch = 0 : i64, scratch_operands = 1 : i64, tpu.core_type = #tpu.core_type<tc>, window_params = [{transform_indices = @transform_0, window_bounds = array<i64: 16, 128>}, {transform_indices = @transform_1, window_bounds = array<i64: 16, 128>}, {transform_indices = @transform_2, window_bounds = array<i64: 8, 128>}]} {
    %c1_i32 = arith.constant 1 : i32
    %0 = arith.muli %arg0, %c1_i32 : i32
    %1 = arith.addi %0, %arg1 : i32
    %c0_i32 = arith.constant 0 : i32
    %2 = arith.cmpi eq, %arg1, %c0_i32 : i32
    %3 = arith.extui %2 : i1 to i32
    %c0_i32_0 = arith.constant 0 : i32
    %4 = arith.cmpi ne, %3, %c0_i32_0 : i32
    scf.if %4 {
      %cst = arith.constant 0.000000e+00 : f32
      %11 = vector.broadcast %cst : f32 to vector<8x128xf32>
      %c0 = arith.constant 0 : index
      %c0_5 = arith.constant 0 : index
      %12 = vector.load %arg5[%c0, %c0_5] : memref<8x128xf32, #tpu.memory_space<vmem>>, vector<8x128xf32>
      tpu.vector_store %arg5[%c0, %c0_5], %11 {strides = array<i32>} : memref<8x128xf32, #tpu.memory_space<vmem>>, vector<8x128xf32>,
    } else {
    }
    %c1_i32_1 = arith.constant 1 : i32
    %5 = arith.cmpi slt, %1, %c1_i32_1 : i32
    %6 = arith.extui %5 : i1 to i32
    %c0_i32_2 = arith.constant 0 : i32
    %7 = arith.cmpi ne, %6, %c0_i32_2 : i32
    scf.if %7 {
      %c0_i32_5 = arith.constant 0 : i32
      %c16_i32 = arith.constant 16 : i32
      %11 = arith.muli %c0_i32_5, %c16_i32 : i32
      %12 = tpu.assume_multiple %11, 16 : i32
      %13 = arith.index_cast %12 : i32 to index
      %c0 = arith.constant 0 : index
      %14 = vector.load %arg2[%13, %c0] : memref<16x128xf32, #tpu.memory_space<vmem>>, vector<16x128xf32>
      %15 = arith.index_cast %12 : i32 to index
      %c0_6 = arith.constant 0 : index
      %16 = vector.load %arg3[%15, %c0_6] : memref<16x128xf32, #tpu.memory_space<vmem>>, vector<16x128xf32>
      %17 = arith.subf %14, %16 : vector<16x128xf32>
      %18 = arith.mulf %17, %17 : vector<16x128xf32>
      %c0_7 = arith.constant 0 : index
      %c0_8 = arith.constant 0 : index
      %19 = vector.load %arg5[%c0_7, %c0_8] : memref<8x128xf32, #tpu.memory_space<vmem>>, vector<8x128xf32>
      %20 = vector.shape_cast %18 : vector<16x128xf32> to vector<2x8x128xf32>
      %cst = arith.constant dense<0.000000e+00> : vector<8x128xf32>
      %21 = vector.multi_reduction <add>, %20, %cst [0] : vector<2x8x128xf32> to vector<8x128xf32>
      %22 = arith.addf %19, %21 : vector<8x128xf32>
      %c0_9 = arith.constant 0 : index
      %c0_10 = arith.constant 0 : index
      %23 = vector.load %arg5[%c0_9, %c0_10] : memref<8x128xf32, #tpu.memory_space<vmem>>, vector<8x128xf32>
      tpu.vector_store %arg5[%c0_9, %c0_10], %22 {strides = array<i32>} : memref<8x128xf32, #tpu.memory_space<vmem>>, vector<8x128xf32>,
      %c1_i32_11 = arith.constant 1 : i32
    } else {
    }
    %c0_i32_3 = arith.constant 0 : i32
    %8 = arith.cmpi eq, %arg1, %c0_i32_3 : i32
    %9 = arith.extui %8 : i1 to i32
    %c0_i32_4 = arith.constant 0 : i32
    %10 = arith.cmpi ne, %9, %c0_i32_4 : i32
    scf.if %10 {
      %c0 = arith.constant 0 : index
      %c0_5 = arith.constant 0 : index
      %11 = vector.load %arg5[%c0, %c0_5] : memref<8x128xf32, #tpu.memory_space<vmem>>, vector<8x128xf32>
      %c0_6 = arith.constant 0 : index
      %c0_7 = arith.constant 0 : index
      %12 = vector.load %arg4[%c0_6, %c0_7] : memref<8x128xf32, #tpu.memory_space<vmem>>, vector<8x128xf32>
      tpu.vector_store %arg4[%c0_6, %c0_7], %11 {strides = array<i32>} : memref<8x128xf32, #tpu.memory_space<vmem>>, vector<8x128xf32>,
    } else {
    }
    return
  }
  func.func @transform_0(%arg0: i32, %arg1: i32) -> (i32, i32) {
    %c1_i32 = arith.constant 1 : i32
    %0 = arith.muli %arg0, %c1_i32 : i32
    %1 = arith.addi %0, %arg1 : i32
    %c0_i32 = arith.constant 0 : i32
    %2 = arith.minsi %1, %c0_i32 : i32
    %c0_i32_0 = arith.constant 0 : i32
    %c0_i32_1 = arith.constant 0 : i32
    return %2, %c0_i32_0 : i32, i32
  }
  func.func @transform_1(%arg0: i32, %arg1: i32) -> (i32, i32) {
    %c1_i32 = arith.constant 1 : i32
    %0 = arith.muli %arg0, %c1_i32 : i32
    %1 = arith.addi %0, %arg1 : i32
    %c0_i32 = arith.constant 0 : i32
    %2 = arith.minsi %1, %c0_i32 : i32
    %c0_i32_0 = arith.constant 0 : i32
    %c0_i32_1 = arith.constant 0 : i32
    return %2, %c0_i32_0 : i32, i32
  }
  func.func @transform_2(%arg0: i32, %arg1: i32) -> (i32, i32) {
    %c0_i32 = arith.constant 0 : i32
    %c0_i32_0 = arith.constant 0 : i32
    return %arg0, %c0_i32 : i32, i32
  }
}

</mosaic_0001>

<llo_original>
// kernel: tpu_custom_call.1
$region0: #{tpu_custom_call.1}
  #allocation0 [shape = 'u32[]', space=smem, size = 0x4, offset = 0x4, fixed_abs, tag = 'smem constant byte address 0x4 - core index']
  #allocation1 [shape = 'u32[144,128]{1,0:T(1,128)}', space=vmem, size = 0x12000, scoped, tag = 'internal scratch']
  #allocation2 [shape = 'f32[8,128]{1,0:T(8,128)}', space=vmem, size = 0x1000, scoped, tag = 'scratch operand']
  %s0 = inlined_call_operand.hbm [shape: f32[16,128], index: 0, kind: input, shape index: {}]
  %s1 = inlined_call_operand.hbm [shape: f32[16,128], index: 1, kind: input, shape index: {}]
  %s2 = inlined_call_operand.hbm [shape: f32[8,128], index: 2, kind: output, shape index: {}]
  %s3 = sld [smem:[#allocation0]]
  $region38: #{tpu_custom_call.1} parent=0
    _
  %s5 = ssub.s32 1, %s3
  %s6 = scalar_select 0, %s5, %s3
  $region1: #{tpu_custom_call.1} parent=0
    #allocation3 [shape = 'u8[8192]{0}', space=vmem, size = 0x2000, scoped, tag = 'input window, operand 0, single buffered']
    #allocation4 [shape = 's32[1]{0}', space=sflag, size = 0x4, scoped, tag = 'scoped memory for tpu_custom_call.1']
    #allocation5 [shape = 's32[1]{0}', space=sflag, size = 0x4, scoped, tag = 'scoped memory for tpu_custom_call.1']
    #allocation6 [shape = 'u8[8192]{0}', space=vmem, size = 0x2000, scoped, tag = 'input window, operand 1, single buffered']
    #allocation7 [shape = 's32[1]{0}', space=sflag, size = 0x4, scoped, tag = 'scoped memory for tpu_custom_call.1']
    #allocation8 [shape = 'u8[4096]{0}', space=vmem, size = 0x1000, scoped, tag = 'output window, operand 0, single buffered']
    %7 = vsyncpa [#allocation4], 0
    %8 = vsyncpa [#allocation7], 0
    %9 = vsyncpa [#allocation5], 0
    // Predicated region
    $region2: #{tpu_custom_call.1} parent=1 // pred_check
      _
    $region3: #{tpu_custom_call.1} parent=1 // pred_check_branch
      %11 = sbr.rel (0) target = $region5
    $region4: #{tpu_custom_call.1} parent=1 // pred_region
      %s12 = sadd.s32 0, 0
      %p13 = scmp.lt.s32.totalorder %s12, 0
      %s14 = scalar_select %p13, %s12, 0
      %s15 = smul.u32 2, %s14
      %s17 = ssub.s32 256, 256
      %18 = vsyncadd [#allocation4], %s17
      %s19 = smul.addr %s15, 128
      %s20 = scalar_lea.hbm %s0, %s19
      %s21 = sshll.u32 [#allocation3], 4
      %s22 = int_to_ptr.vmem [resolvable:$true] %s21
      %27 = dma.hbm_to_vmem [thread:$0]  %s20, 256, %s22, [#allocation4], 128, 128, 8
    $region5: #{tpu_custom_call.1} parent=1 // pred_fallthru
      _
    // Predicated region
    $region6: #{tpu_custom_call.1} parent=1 // pred_check
      _
    $region7: #{tpu_custom_call.1} parent=1 // pred_check_branch
      %29 = sbr.rel (0) target = $region9
    $region8: #{tpu_custom_call.1} parent=1 // pred_region
      %s30 = sadd.s32 0, 0
      %p31 = scmp.lt.s32.totalorder %s30, 0
      %s32 = scalar_select %p31, %s30, 0
      %s33 = smul.u32 2, %s32
      %s35 = ssub.s32 256, 256
      %36 = vsyncadd [#allocation7], %s35
      %s37 = smul.addr %s33, 128
      %s38 = scalar_lea.hbm %s1, %s37
      %s39 = sshll.u32 [#allocation6], 4
      %s40 = int_to_ptr.vmem [resolvable:$true] %s39
      %45 = dma.hbm_to_vmem [thread:$0]  %s38, 256, %s40, [#allocation7], 128, 128, 8
    $region9: #{tpu_custom_call.1} parent=1 // pred_fallthru
      _
    // Predicated region
    $region10: #{tpu_custom_call.1} parent=1 // pred_check
      _
    $region11: #{tpu_custom_call.1} parent=1 // pred_check_branch
      %47 = sbr.rel (0) target = $region13
    $region12: #{tpu_custom_call.1} parent=1 // pred_region
      %48 = dma.done [#allocation4], 256
    $region13: #{tpu_custom_call.1} parent=1 // pred_fallthru
      _
    // Predicated region
    $region14: #{tpu_custom_call.1} parent=1 // pred_check
      _
    $region15: #{tpu_custom_call.1} parent=1 // pred_check_branch
      %50 = sbr.rel (0) target = $region17
    $region16: #{tpu_custom_call.1} parent=1 // pred_region
      %51 = dma.done [#allocation7], 256
    $region17: #{tpu_custom_call.1} parent=1 // pred_fallthru
      _
    %s52 = sadd.s32 0, 0
    %p53 = scmp.lt.s32.totalorder %s52, 0
    %s54 = scalar_select %p53, %s52, 0
    %s55 = smul.u32 2, %s54
    %s56 = sadd.s32 0, 0
    %p57 = scmp.lt.s32.totalorder %s56, 0
    %s58 = scalar_select %p57, %s56, 0
    %s59 = smul.u32 2, %s58
    %s60 = sadd.s32 0, 0
    %p61 = scmp.eq.s32.totalorder 0, 0
    // Predicated region
    $region18: #{tpu_custom_call.1} parent=1 // pred_check
      %p62 = pneg %p61
    $region19: #{tpu_custom_call.1} parent=1 // pred_check_branch
      %64 = sbr.rel (%p62) target = $region21
    $region20: #{tpu_custom_call.1} parent=1 // pred_region
      %65 = vst [vmem:[#allocation2] sm:$0xff] 0.0
    $region21: #{tpu_custom_call.1} parent=1 // pred_fallthru
      _
    %p66 = scmp.lt.s32.totalorder %s60, 1
    // Predicated region
    $region22: #{tpu_custom_call.1} parent=1 // pred_check
      %p67 = pneg %p66
    $region23: #{tpu_custom_call.1} parent=1 // pred_check_branch
      %69 = sbr.rel (%p67) target = $region25
    $region24: #{tpu_custom_call.1} parent=1 // pred_region
      %v70 = vld [vmem:[#allocation3] sm:$0xff]
      %v71 = vld [vmem:[#allocation3 + $0x8] sm:$0xff]
      %v72 = vld [vmem:[#allocation6] sm:$0xff]
      %v73 = vld [vmem:[#allocation6 + $0x8] sm:$0xff]
      %v74 = vsub.f32 %v70, %v72
      %v75 = vsub.f32 %v71, %v73
      %v76 = vmul.f32 %v74, %v74
      %v77 = vmul.f32 %v75, %v75
      %v78 = vld [vmem:[#allocation2] sm:$0xff]
      %v79 = vadd.f32 %v76, %v77
      %v80 = vadd.f32 %v78, %v79
      %81 = vst [vmem:[#allocation2] sm:$0xff] %v80
    $region25: #{tpu_custom_call.1} parent=1 // pred_fallthru
      _
    // Predicated region
    $region26: #{tpu_custom_call.1} parent=1 // pred_check
      %p82 = pneg %p61
    $region27: #{tpu_custom_call.1} parent=1 // pred_check_branch
      %84 = sbr.rel (%p82) target = $region29
    $region28: #{tpu_custom_call.1} parent=1 // pred_region
      %v85 = vld [vmem:[#allocation2] sm:$0xff]
      %86 = vst [vmem:[#allocation8] sm:$0xff] %v85
    $region29: #{tpu_custom_call.1} parent=1 // pred_fallthru
      _
    // Predicated region
    $region30: #{tpu_custom_call.1} parent=1 // pred_check
      _
    $region31: #{tpu_custom_call.1} parent=1 // pred_check_branch
      %88 = sbr.rel (0) target = $region33
    $region32: #{tpu_custom_call.1} parent=1 // pred_region
      %s90 = ssub.s32 128, 128
      %91 = vsyncadd [#allocation5], %s90
      %s93 = sshll.u32 [#allocation8], 4
      %s94 = int_to_ptr.vmem [resolvable:$true] %s93
      %96 = dma.vmem_to_hbm [thread:$0]  %s94, 128, %s2, [#allocation5]
    $region33: #{tpu_custom_call.1} parent=1 // pred_fallthru
      _
    // Predicated region
    $region34: #{tpu_custom_call.1} parent=1 // pred_check
      _
    $region35: #{tpu_custom_call.1} parent=1 // pred_check_branch
      %98 = sbr.rel (0) target = $region37
    $region36: #{tpu_custom_call.1} parent=1 // pred_region
      %99 = dma.done [#allocation5], 128
    $region37: #{tpu_custom_call.1} parent=1 // pred_fallthru
      _
    %100 = vsyncpa [#allocation4], 1
    %101 = vsyncpa [#allocation7], 1
    %102 = vsyncpa [#allocation5], 1

</llo_original>
